<compile_context>
chip_gen: v6e
topology: v6e:2x2x1
jax: 0.10.0
libtpu: 0.0.40
codegen_flags: <defaults>
</compile_context>

<pallas_src>
import functools
import math

import jax
import jax.numpy as jnp
from jax.experimental import pallas as pl
from jax.experimental.pallas import tpu as pltpu


def _round_up(n, m):
    return ((n + m - 1) // m) * m


def _one_eup_sigmoid(s, dtype):
    """sigmoid(x) == 0.5*(tanh(x/2)+1): a single EUP op (vs exp + divide)."""
    s = s.astype(dtype)
    return jnp.tanh(s * 0.5) * 0.5 + 0.5


# --------------------------------------------------------------------------
# Linear projection kernels:  y = x @ w + b   (w pre-transposed to [Din, Dout])
# --------------------------------------------------------------------------
def _linear_simple_kernel(x_ref, w_ref, b_ref, o_ref):
    acc = jnp.dot(x_ref[...], w_ref[...], preferred_element_type=jnp.float32)
    o_ref[...] = (acc + b_ref[...].astype(jnp.float32)).astype(o_ref.dtype)


def _linear_ktiled_kernel(x_ref, w_ref, b_ref, o_ref, acc_ref):
    k = pl.program_id(1)

    @pl.when(k == 0)
    def _():
        acc_ref[...] = jnp.zeros_like(acc_ref)

    acc_ref[...] += jnp.dot(x_ref[...], w_ref[...],
                            preferred_element_type=jnp.float32)

    @pl.when(k == pl.num_programs(1) - 1)
    def _():
        o_ref[...] = (acc_ref[...] + b_ref[...].astype(jnp.float32)).astype(o_ref.dtype)


def _linear(x, w, b, *, row_tile, out_dtype, weight_budget_bytes=8 << 20):
    """x: [R, Din], w: [Din, Dout], b: [1, Dout]; R % row_tile == 0, dims 128-aligned."""
    rows, din = x.shape
    dout = w.shape[1]
    if din * dout * w.dtype.itemsize <= weight_budget_bytes:
        # Weights VMEM-resident, single K block.
        return pl.pallas_call(
            _linear_simple_kernel,
            out_shape=jax.ShapeDtypeStruct((rows, dout), out_dtype),
            grid_spec=pltpu.PrefetchScalarGridSpec(
                num_scalar_prefetch=0,
                grid=(rows // row_tile,),
                in_specs=[
                    pl.BlockSpec((row_tile, din), lambda i: (i, 0)),
                    pl.BlockSpec((din, dout), lambda i: (0, 0)),
                    pl.BlockSpec((1, dout), lambda i: (0, 0)),
                ],
                out_specs=pl.BlockSpec((row_tile, dout), lambda i: (i, 0)),
            ),
            compiler_params=pltpu.CompilerParams(
                dimension_semantics=("parallel",)),
        )(x, w, b)

    # Large-weight fallback: tile the din (reduction) axis with an f32 accumulator.
    tk = next(t for t in (512, 256, 128) if din % t == 0)
    return pl.pallas_call(
        _linear_ktiled_kernel,
        out_shape=jax.ShapeDtypeStruct((rows, dout), out_dtype),
        grid_spec=pltpu.PrefetchScalarGridSpec(
            num_scalar_prefetch=0,
            grid=(rows // row_tile, din // tk),
            in_specs=[
                pl.BlockSpec((row_tile, tk), lambda i, k: (i, k)),
                pl.BlockSpec((tk, dout), lambda i, k: (k, 0)),
                pl.BlockSpec((1, dout), lambda i, k: (0, 0)),
            ],
            out_specs=pl.BlockSpec((row_tile, dout), lambda i, k: (i, 0)),
            scratch_shapes=[pltpu.VMEM((row_tile, dout), jnp.float32)],
        ),
        compiler_params=pltpu.CompilerParams(
            dimension_semantics=("parallel", "arbitrary")),
    )(x, w, b)


# --------------------------------------------------------------------------
# Fused K/V projection (one pass over x, two outputs) with in-kernel V masking.
# --------------------------------------------------------------------------
def _kv_proj_kernel(x_ref, wk_ref, bk_ref, wv_ref, bv_ref, k_out, v_out, *,
                    sx, row_tile):
    x = x_ref[...]
    k = (jnp.dot(x, wk_ref[...], preferred_element_type=jnp.float32)
         + bk_ref[...].astype(jnp.float32))
    v = (jnp.dot(x, wv_ref[...], preferred_element_type=jnp.float32)
         + bv_ref[...].astype(jnp.float32))
    # Kill padded kv rows through V (sigmoid(anything)=~0.5, so score-side
    # padding is NOT automatically harmless).
    row = pl.program_id(0) * row_tile + jax.lax.broadcasted_iota(jnp.int32, v.shape, 0)
    v = jnp.where(row < sx, v, 0.0)
    k_out[...] = k.astype(k_out.dtype)
    v_out[...] = v.astype(v_out.dtype)


def _kv_projection(x, wk, bk, wv, bv, *, sx, row_tile, out_dtype,
                   weight_budget_bytes=8 << 20):
    rows, din = x.shape
    dout = wk.shape[1]
    if 2 * din * dout * wk.dtype.itemsize <= weight_budget_bytes:
        kern = functools.partial(_kv_proj_kernel, sx=sx, row_tile=row_tile)
        return pl.pallas_call(
            kern,
            out_shape=(jax.ShapeDtypeStruct((rows, dout), out_dtype),
                       jax.ShapeDtypeStruct((rows, dout), out_dtype)),
            grid_spec=pltpu.PrefetchScalarGridSpec(
                num_scalar_prefetch=0,
                grid=(rows // row_tile,),
                in_specs=[
                    pl.BlockSpec((row_tile, din), lambda i: (i, 0)),
                    pl.BlockSpec((din, dout), lambda i: (0, 0)),
                    pl.BlockSpec((1, dout), lambda i: (0, 0)),
                    pl.BlockSpec((din, dout), lambda i: (0, 0)),
                    pl.BlockSpec((1, dout), lambda i: (0, 0)),
                ],
                out_specs=(pl.BlockSpec((row_tile, dout), lambda i: (i, 0)),
                           pl.BlockSpec((row_tile, dout), lambda i: (i, 0))),
            ),
            compiler_params=pltpu.CompilerParams(
                dimension_semantics=("parallel",)),
        )(x, wk, bk, wv, bv)

    # Large-weight fallback: two k-tiled linears + external V mask.
    K = _linear(x, wk, bk, row_tile=row_tile, out_dtype=out_dtype)
    V = _linear(x, wv, bv, row_tile=row_tile, out_dtype=out_dtype)
    valid = (jnp.arange(rows) < sx)[:, None]
    V = jnp.where(valid, V, jnp.zeros_like(V))
    return K, V


# --------------------------------------------------------------------------
# Attention kernels.
# --------------------------------------------------------------------------
def _attn_resident_kernel(q_ref, k_ref, v_ref, o_ref, acc_ref, *, score_dtype):
    """K/V VMEM-resident, shaped (n_kv, tkv, dout); kv reduction runs in-kernel."""
    acc_ref[...] = jnp.zeros_like(acc_ref)
    q = q_ref[...]
    n_kv = k_ref.shape[0]

    @pl.loop(0, n_kv)
    def _(j):
        k = k_ref[j]
        v = v_ref[j]
        # Contract last dims of Q and K directly (no K transpose on the XLU).
        s = jax.lax.dot_general(q, k, (((1,), (1,)), ((), ())),
                                preferred_element_type=jnp.float32)
        p = _one_eup_sigmoid(s, score_dtype)      # scale folded into wq/bq
        acc_ref[...] += jnp.dot(p.astype(v.dtype), v,
                                preferred_element_type=jnp.float32)

    o_ref[...] = acc_ref[...].astype(o_ref.dtype)


def _attn_grid_kernel(q_ref, k_ref, v_ref, o_ref, acc_ref, *, score_dtype):
    """Fallback for K/V too large for VMEM residency: kv grid axis + accumulator."""
    kv = pl.program_id(1)

    @pl.when(kv == 0)
    def _():
        acc_ref[...] = jnp.zeros_like(acc_ref)

    s = jax.lax.dot_general(q_ref[...], k_ref[...], (((1,), (1,)), ((), ())),
                            preferred_element_type=jnp.float32)
    p = _one_eup_sigmoid(s, score_dtype)
    acc_ref[...] += jnp.dot(p.astype(v_ref.dtype), v_ref[...],
                            preferred_element_type=jnp.float32)

    @pl.when(kv == pl.num_programs(1) - 1)
    def _():
        o_ref[...] = acc_ref[...].astype(o_ref.dtype)


def attention_forward(q, x, params, *, compute_dtype=jnp.bfloat16,
                      score_dtype=None):
    """q: [Sq, Din], x: [Sx, Din]; params: wq/bq/wk/bk/wv/bv (nn.Linear layout).

    On v5e pass score_dtype=jnp.float32 (no bf16 VPU/EUP) while keeping bf16
    matmuls; on v6e/v7x the default (score_dtype == compute_dtype) is best.
    """
    if score_dtype is None:
        score_dtype = compute_dtype
    sq, din = q.shape
    sx = x.shape[0]
    dout = params["wq"].shape[0]
    scale = 1.0 / math.sqrt(float(dout))
    cd = compute_dtype
    itemsize = jnp.dtype(cd).itemsize
    sub = 16 if itemsize == 2 else 8          # bf16 packs (16,128) per vreg

    # ---- padded / tiled geometry -----------------------------------------
    din_p = _round_up(din, 128)
    dout_p = _round_up(dout, 128)

    # q tiling: keep grid[0] >= 2 for medium Sq (v7x has 2 TCs on the parallel axis)
    sq_p = _round_up(sq, sub)
    if sq_p >= 512:
        tq = 256
    elif sq_p >= 256:
        tq = 128
    else:
        tq = sq_p
    sq_p = _round_up(sq_p, tq)

    # kv length: multiple of 128 for lane-dense score tiles.
    sx_p = _round_up(sx, 128)
    kv_bytes = 2 * sx_p * dout_p * itemsize
    resident = kv_bytes <= (8 << 20)          # fits comfortably on all generations
    if resident:
        tkv = sx_p if sx_p <= 1024 else 512
        sx_p = _round_up(sx_p, tkv)
        n_kv = sx_p // tkv
    else:
        tkv = next(t for t in (1024, 512, 256, 128) if sx_p % t == 0)
        n_kv = sx_p // tkv
    row_kv = next(t for t in (512, 256, 128) if sx_p % t == 0)

    # ---- pad & cast directly in compute_dtype -----------------------------
    q_c = jnp.zeros((sq_p, din_p), cd).at[:sq, :din].set(q.astype(cd))
    x_c = jnp.zeros((sx_p, din_p), cd).at[:sx, :din].set(x.astype(cd))

    def pad_wb(w, b, s=1.0):
        wt = jnp.zeros((din_p, dout_p), cd).at[:din, :dout].set((w.T * s).astype(cd))
        bb = jnp.zeros((1, dout_p), cd).at[:, :dout].set((b * s).astype(cd))
        return wt, bb

    # Fold the 1/sqrt(d) scale into the Q projection (O(Sq*Dout), not O(Sq*Sx)).
    wq_t, bq = pad_wb(params["wq"], params["bq"], scale)
    wk_t, bk = pad_wb(params["wk"], params["bk"])
    wv_t, bv = pad_wb(params["wv"], params["bv"])

    # ---- hoisted projections (Q alone; K/V fused, V-mask inside) ----------
    Q = _linear(q_c, wq_t, bq, row_tile=tq, out_dtype=cd)
    K, V = _kv_projection(x_c, wk_t, bk, wv_t, bv, sx=sx, row_tile=row_kv,
                          out_dtype=cd)

    # ---- attention ---------------------------------------------------------
    if resident:
        K3 = K.reshape(n_kv, tkv, dout_p)
        V3 = V.reshape(n_kv, tkv, dout_p)
        cost = pl.CostEstimate(
            flops=4 * sq_p * sx_p * dout_p,
            transcendentals=sq_p * sx_p,
            bytes_accessed=(sq_p * dout_p + 2 * sx_p * dout_p) * itemsize
                           + sq_p * dout_p * 4)
        out = pl.pallas_call(
            functools.partial(_attn_resident_kernel, score_dtype=score_dtype),
            out_shape=jax.ShapeDtypeStruct((sq_p, dout_p), jnp.float32),
            grid_spec=pltpu.PrefetchScalarGridSpec(
                num_scalar_prefetch=0,
                grid=(sq_p // tq,),
                in_specs=[
                    pl.BlockSpec((tq, dout_p), lambda i: (i, 0)),
                    pl.BlockSpec((n_kv, tkv, dout_p), lambda i: (0, 0, 0)),  # K resident
                    pl.BlockSpec((n_kv, tkv, dout_p), lambda i: (0, 0, 0)),  # V resident
                ],
                out_specs=pl.BlockSpec((tq, dout_p), lambda i: (i, 0)),
                scratch_shapes=[pltpu.VMEM((tq, dout_p), jnp.float32)],
            ),
            compiler_params=pltpu.CompilerParams(
                dimension_semantics=("parallel",)),
            cost_estimate=cost,
        )(Q, K3, V3)
    else:
        grid = (sq_p // tq, n_kv)
        cost = pl.CostEstimate(
            flops=4 * sq_p * sx_p * dout_p,
            transcendentals=sq_p * sx_p,
            bytes_accessed=(sq_p * dout_p + 2 * sx_p * dout_p * grid[0]) * itemsize
                           + sq_p * dout_p * 4)
        out = pl.pallas_call(
            functools.partial(_attn_grid_kernel, score_dtype=score_dtype),
            out_shape=jax.ShapeDtypeStruct((sq_p, dout_p), jnp.float32),
            grid_spec=pltpu.PrefetchScalarGridSpec(
                num_scalar_prefetch=0,
                grid=grid,
                in_specs=[
                    pl.BlockSpec((tq, dout_p), lambda i, k: (i, 0)),
                    pl.BlockSpec((tkv, dout_p), lambda i, k: (k, 0)),
                    pl.BlockSpec((tkv, dout_p), lambda i, k: (k, 0)),
                ],
                out_specs=pl.BlockSpec((tq, dout_p), lambda i, k: (i, 0)),
                scratch_shapes=[pltpu.VMEM((tq, dout_p), jnp.float32)],
            ),
            compiler_params=pltpu.CompilerParams(
                dimension_semantics=("parallel", "arbitrary")),
            cost_estimate=cost,
        )(Q, K, V)

    return out[:sq, :dout]


# --------------------------------------------------------------------------
# Param init + pure-JAX reference
# --------------------------------------------------------------------------
def init_params(key, in_size, out_size):
    bound = 1.0 / math.sqrt(in_size)
    ks = jax.random.split(key, 6)
    u = lambda k, shape: jax.random.uniform(k, shape, jnp.float32, -bound, bound)
    return {
        "wq": u(ks[0], (out_size, in_size)), "bq": u(ks[1], (out_size,)),
        "wk": u(ks[2], (out_size, in_size)), "bk": u(ks[3], (out_size,)),
        "wv": u(ks[4], (out_size, in_size)), "bv": u(ks[5], (out_size,)),
    }


def reference_forward(q, x, params):
    dout = params["wq"].shape[0]
    hi = jax.lax.Precision.HIGHEST
    dot = functools.partial(jnp.dot, precision=hi)
    Q = dot(q, params["wq"].T) + params["bq"]
    K = dot(x, params["wk"].T) + params["bk"]
    V = dot(x, params["wv"].T) + params["bv"]
    S = jax.nn.sigmoid(dot(Q, K.T) / math.sqrt(float(dout)))
    return dot(S, V)


if __name__ == "__main__":
    key = jax.random.PRNGKey(0)

    # --- small demo shape (module-sized), f32 path: tight check -----------
    k_q, k_x, k_p = jax.random.split(key, 3)
    seq_q, seq_x, in_size, out_size = 8, 8, 32, 32
    q = jax.random.normal(k_q, (seq_q, in_size), jnp.float32)
    x = jax.random.normal(k_x, (seq_x, in_size), jnp.float32)
    params = init_params(k_p, in_size, out_size)

    ref = reference_forward(q, x, params)

    out_f32 = jax.block_until_ready(
        attention_forward(q, x, params, compute_dtype=jnp.float32))
    assert out_f32.shape == (seq_q, out_size)
    assert jnp.allclose(out_f32, ref, atol=2e-3, rtol=2e-3), "f32 mismatch vs reference"

    # default bf16 MXU + bf16 tanh-sigmoid path: looser tolerance
    out_bf16 = jax.block_until_ready(attention_forward(q, x, params))
    assert jnp.allclose(out_bf16, ref, atol=5e-2, rtol=5e-2), "bf16 mismatch vs reference"

    # --- non-tile-aligned shape: exercises q-grid, in-kernel kv loop, kv mask
    k_q2, k_x2, k_p2 = jax.random.split(jax.random.PRNGKey(1), 3)
    sq2, sx2, din2, dout2 = 300, 700, 64, 96
    q2 = jax.random.normal(k_q2, (sq2, din2), jnp.float32)
    x2 = jax.random.normal(k_x2, (sx2, din2), jnp.float32)
    params2 = init_params(k_p2, din2, dout2)
    ref2 = reference_forward(q2, x2, params2)

    out2 = jax.block_until_ready(
        attention_forward(q2, x2, params2, compute_dtype=jnp.float32))
    assert out2.shape == (sq2, dout2)
    assert jnp.allclose(out2, ref2, atol=2e-2, rtol=2e-3), "tiled f32 mismatch vs reference"

    # tiled bf16 path (per review: validate the ragged bf16 case too)
    out2_bf16 = jax.block_until_ready(attention_forward(q2, x2, params2))
    rel = jnp.linalg.norm(out2_bf16.astype(jnp.float32) - ref2) / jnp.linalg.norm(ref2)
    assert rel < 2e-2, f"tiled bf16 relative error too large: {rel}"

    print("KERNEL_OK")
</pallas_src>

<mosaic_0001>
module attributes {stable_mosaic.version = 11 : i64} {
  func.func @_linear_simple_kernel(%arg0: i32, %arg1: memref<8x128xf32, #tpu.memory_space<vmem>>, %arg2: memref<128x128xf32, #tpu.memory_space<vmem>>, %arg3: memref<1x128xf32, #tpu.memory_space<vmem>>, %arg4: memref<8x128xf32, #tpu.memory_space<vmem>>) attributes {dimension_semantics = [#tpu.dimension_semantics<parallel>], iteration_bounds = array<i64: 1>, scalar_prefetch = 0 : i64, scratch_operands = 0 : i64, tpu.core_type = #tpu.core_type<tc>, window_params = [{transform_indices = @transform_0, window_bounds = array<i64: 8, 128>}, {pipeline_mode = #tpu.pipeline_mode<synchronous>, transform_indices = @transform_1, window_bounds = array<i64: 128, 128>}, {pipeline_mode = #tpu.pipeline_mode<synchronous>, transform_indices = @transform_2, window_bounds = array<i64: 1, 128>}, {transform_indices = @transform_3, window_bounds = array<i64: 8, 128>}]} {
    %c0 = arith.constant 0 : index
    %c0_0 = arith.constant 0 : index
    %0 = vector.load %arg1[%c0, %c0_0] : memref<8x128xf32, #tpu.memory_space<vmem>>, vector<8x128xf32>
    %c0_1 = arith.constant 0 : index
    %c0_2 = arith.constant 0 : index
    %1 = vector.load %arg2[%c0_1, %c0_2] : memref<128x128xf32, #tpu.memory_space<vmem>>, vector<128x128xf32>
    %cst = arith.constant dense<0.000000e+00> : vector<8x128xf32>
    %2 = tpu.matmul %0, %1, %cst {dimension_numbers = #tpu.dot_dimension_numbers<[1], [0], [0], [1], [0, 0, 1, 1], [], []>} : vector<8x128xf32>, vector<128x128xf32>, vector<8x128xf32> -> vector<8x128xf32>
    %c0_3 = arith.constant 0 : index
    %c0_4 = arith.constant 0 : index
    %3 = vector.load %arg3[%c0_3, %c0_4] : memref<1x128xf32, #tpu.memory_space<vmem>>, vector<1x128xf32>
    %4 = vector.broadcast %3 : vector<1x128xf32> to vector<8x128xf32>
    %5 = arith.addf %2, %4 : vector<8x128xf32>
    %c0_5 = arith.constant 0 : index
    %c0_6 = arith.constant 0 : index
    %6 = vector.load %arg4[%c0_5, %c0_6] : memref<8x128xf32, #tpu.memory_space<vmem>>, vector<8x128xf32>
    tpu.vector_store %arg4[%c0_5, %c0_6], %5 {strides = array<i32>} : memref<8x128xf32, #tpu.memory_space<vmem>>, vector<8x128xf32>,
    return
  }
  func.func @transform_0(%arg0: i32) -> (i32, i32) {
    %c0_i32 = arith.constant 0 : i32
    %c0_i32_0 = arith.constant 0 : i32
    return %arg0, %c0_i32 : i32, i32
  }
  func.func @transform_1(%arg0: i32) -> (i32, i32) {
    %c0_i32 = arith.constant 0 : i32
    %c0_i32_0 = arith.constant 0 : i32
    %c0_i32_1 = arith.constant 0 : i32
    return %c0_i32, %c0_i32_0 : i32, i32
  }
  func.func @transform_2(%arg0: i32) -> (i32, i32) {
    %c0_i32 = arith.constant 0 : i32
    %c0_i32_0 = arith.constant 0 : i32
    %c0_i32_1 = arith.constant 0 : i32
    return %c0_i32, %c0_i32_0 : i32, i32
  }
  func.func @transform_3(%arg0: i32) -> (i32, i32) {
    %c0_i32 = arith.constant 0 : i32
    %c0_i32_0 = arith.constant 0 : i32
    return %arg0, %c0_i32 : i32, i32
  }
}

</mosaic_0001>

<llo_original>
// kernel: tpu_custom_call.1
$region0: #{tpu_custom_call.1}
  #allocation0 [shape = 'u32[]', space=smem, size = 0x4, offset = 0x4, fixed_abs, tag = 'smem constant byte address 0x4 - core index']
  #allocation1 [shape = 'u32[144,128]{1,0:T(1,128)}', space=vmem, size = 0x12000, scoped, tag = 'internal scratch']
  %s0 = inlined_call_operand.hbm [shape: f32[8,128], index: 0, kind: input, shape index: {}]
  %s1 = inlined_call_operand.hbm [shape: f32[128,128], index: 1, kind: input, shape index: {}]
  %s2 = inlined_call_operand.vmem [shape: f32[1,128], index: 2, kind: input, shape index: {}]
  %s3 = inlined_call_operand.hbm [shape: f32[8,128], index: 3, kind: output, shape index: {}]
  %s4 = sld [smem:[#allocation0]]
  $region30: #{tpu_custom_call.1} parent=0
    _
  %s6 = ssub.s32 1, %s4
  %s7 = scalar_select 0, %s6, %s4
  $region1: #{tpu_custom_call.1} parent=0
    #allocation2 [shape = 'u8[4096]{0}', space=vmem, size = 0x1000, scoped, tag = 'input window, operand 0, single buffered']
    #allocation3 [shape = 's32[1]{0}', space=sflag, size = 0x4, scoped, tag = 'scoped memory for tpu_custom_call.1']
    #allocation4 [shape = 's32[1]{0}', space=sflag, size = 0x4, scoped, tag = 'scoped memory for tpu_custom_call.1']
    #allocation5 [shape = 'u8[65536]{0}', space=vmem, size = 0x10000, scoped, tag = 'input window, operand 1, single buffered']
    #allocation6 [shape = 's32[1]{0}', space=sflag, size = 0x4, scoped, tag = 'scoped memory for tpu_custom_call.1']
    #allocation7 [shape = 'u8[4096]{0}', space=vmem, size = 0x1000, scoped, tag = 'output window, operand 0, single buffered']
    %8 = vsyncpa [#allocation3], 0
    %9 = vsyncpa [#allocation6], 0
    %10 = vsyncpa [#allocation4], 0
    // Predicated region
    $region2: #{tpu_custom_call.1} parent=1 // pred_check
      _
    $region3: #{tpu_custom_call.1} parent=1 // pred_check_branch
      %12 = sbr.rel (0) target = $region5
    $region4: #{tpu_custom_call.1} parent=1 // pred_region
      %s14 = ssub.s32 128, 128
      %15 = vsyncadd [#allocation3], %s14
      %s17 = sshll.u32 [#allocation2], 4
      %s18 = int_to_ptr.vmem [resolvable:$true] %s17
      %20 = dma.hbm_to_vmem [thread:$0]  %s0, 128, %s18, [#allocation3]
    $region5: #{tpu_custom_call.1} parent=1 // pred_fallthru
      _
    // Predicated region
    $region6: #{tpu_custom_call.1} parent=1 // pred_check
      _
    $region7: #{tpu_custom_call.1} parent=1 // pred_check_branch
      %22 = sbr.rel (0) target = $region9
    $region8: #{tpu_custom_call.1} parent=1 // pred_region
      %s24 = ssub.s32 2048, 2048
      %25 = vsyncadd [#allocation6], %s24
      %s26 = sshll.u32 [#allocation5], 4
      %s27 = int_to_ptr.vmem [resolvable:$true] %s26
      %32 = dma.hbm_to_vmem [thread:$0]  %s1, 2048, %s27, [#allocation6], 128, 128, 8
    $region9: #{tpu_custom_call.1} parent=1 // pred_fallthru
      _
    // Predicated region
    $region10: #{tpu_custom_call.1} parent=1 // pred_check
      _
    $region11: #{tpu_custom_call.1} parent=1 // pred_check_branch
      %34 = sbr.rel (0) target = $region13
    $region12: #{tpu_custom_call.1} parent=1 // pred_region
      _
    $region13: #{tpu_custom_call.1} parent=1 // pred_fallthru
      _
    // Predicated region
    $region14: #{tpu_custom_call.1} parent=1 // pred_check
      _
    $region15: #{tpu_custom_call.1} parent=1 // pred_check_branch
      %36 = sbr.rel (0) target = $region17
    $region16: #{tpu_custom_call.1} parent=1 // pred_region
      %37 = dma.done [#allocation3], 128
    $region17: #{tpu_custom_call.1} parent=1 // pred_fallthru
      _
    // Predicated region
    $region18: #{tpu_custom_call.1} parent=1 // pred_check
      _
    $region19: #{tpu_custom_call.1} parent=1 // pred_check_branch
      %39 = sbr.rel (0) target = $region21
    $region20: #{tpu_custom_call.1} parent=1 // pred_region
      %40 = dma.done [#allocation6], 2048
    $region21: #{tpu_custom_call.1} parent=1 // pred_fallthru
      _
    %v41 = vld [vmem:[#allocation2] sm:$0xff]
    %v42 = vld [vmem:[#allocation5] sm:$0xff]
    %v43 = vld [vmem:[#allocation5 + $0x8] sm:$0xff]
    %v44 = vld [vmem:[#allocation5 + $0x10] sm:$0xff]
    %v45 = vld [vmem:[#allocation5 + $0x18] sm:$0xff]
    %v46 = vld [vmem:[#allocation5 + $0x20] sm:$0xff]
    %v47 = vld [vmem:[#allocation5 + $0x28] sm:$0xff]
    %v48 = vld [vmem:[#allocation5 + $0x30] sm:$0xff]
    %v49 = vld [vmem:[#allocation5 + $0x38] sm:$0xff]
    %v50 = vld [vmem:[#allocation5 + $0x40] sm:$0xff]
    %v51 = vld [vmem:[#allocation5 + $0x48] sm:$0xff]
    %v52 = vld [vmem:[#allocation5 + $0x50] sm:$0xff]
    %v53 = vld [vmem:[#allocation5 + $0x58] sm:$0xff]
    %v54 = vld [vmem:[#allocation5 + $0x60] sm:$0xff]
    %v55 = vld [vmem:[#allocation5 + $0x68] sm:$0xff]
    %v56 = vld [vmem:[#allocation5 + $0x70] sm:$0xff]
    %v57 = vld [vmem:[#allocation5 + $0x78] sm:$0xff]
    %v58 = vld [vmem:[%s2] sm:$0x1]
    %v60 = vlaneseq
    %v61 = vshrl.u32 %v60, 7
    %v62 = vsub.s32 0, %v61
    %v63 = vrot.slane %v58, %v62
    %65 = vmatprep.subr.mxu0 0.0
    %66 = vmatpush1.msra.mxu0 %v57
    %67 = vmatprep.subr.mxu0 0.0
    %68 = vmatpush1.msra.mxu0 %v56
    %69 = vmatprep.subr.mxu0 0.0
    %70 = vmatpush1.msra.mxu0 %v55
    %71 = vmatprep.subr.mxu0 0.0
    %72 = vmatpush1.msra.mxu0 %v54
    %73 = vmatprep.subr.mxu0 0.0
    %74 = vmatpush1.msra.mxu0 %v53
    %75 = vmatprep.subr.mxu0 0.0
    %76 = vmatpush1.msra.mxu0 %v52
    %77 = vmatprep.subr.mxu0 0.0
    %78 = vmatpush1.msra.mxu0 %v51
    %79 = vmatprep.subr.mxu0 0.0
    %80 = vmatpush1.msra.mxu0 %v50
    %81 = vmatprep.subr.mxu0 0.0
    %82 = vmatpush1.msra.mxu0 %v49
    %83 = vmatprep.subr.mxu0 0.0
    %84 = vmatpush1.msra.mxu0 %v48
    %85 = vmatprep.subr.mxu0 0.0
    %86 = vmatpush1.msra.mxu0 %v47
    %87 = vmatprep.subr.mxu0 0.0
    %88 = vmatpush1.msra.mxu0 %v46
    %89 = vmatprep.subr.mxu0 0.0
    %90 = vmatpush1.msra.mxu0 %v45
    %91 = vmatprep.subr.mxu0 0.0
    %92 = vmatpush1.msra.mxu0 %v44
    %93 = vmatprep.subr.mxu0 0.0
    %94 = vmatpush1.msra.mxu0 %v43
    %95 = vmatprep.subr.mxu0 0.0
    %96 = vmatpush1.msra.mxu0 %v42
    %97 = vmatprep.subr.mxu0 0.0
    %98 = vmatpush2.msra.mxu0 0.0
    %99 = vmatprep.subr.mxu0 0.0
    %100 = vmatpush2.msra.mxu0 0.0
    %101 = vmatprep.subr.mxu0 0.0
    %102 = vmatpush2.msra.mxu0 0.0
    %103 = vmatprep.subr.mxu0 0.0
    %104 = vmatpush2.msra.mxu0 0.0
    %105 = vmatprep.subr.mxu0 0.0
    %106 = vmatpush2.msra.mxu0 0.0
    %107 = vmatprep.subr.mxu0 0.0
    %108 = vmatpush2.msra.mxu0 0.0
    %109 = vmatprep.subr.mxu0 0.0
    %110 = vmatpush2.msra.mxu0 0.0
    %111 = vmatprep.subr.mxu0 0.0
    %112 = vmatpush2.msra.mxu0 0.0
    %113 = vmatprep.subr.mxu0 0.0
    %114 = vmatpush2.msra.mxu0 0.0
    %115 = vmatprep.subr.mxu0 0.0
    %116 = vmatpush2.msra.mxu0 0.0
    %117 = vmatprep.subr.mxu0 0.0
    %118 = vmatpush2.msra.mxu0 0.0
    %119 = vmatprep.subr.mxu0 0.0
    %120 = vmatpush2.msra.mxu0 0.0
    %121 = vmatprep.subr.mxu0 0.0
    %122 = vmatpush2.msra.mxu0 0.0
    %123 = vmatprep.subr.mxu0 0.0
    %124 = vmatpush2.msra.mxu0 0.0
    %125 = vmatprep.subr.mxu0 0.0
    %126 = vmatpush2.msra.mxu0 0.0
    %127 = vmatprep.subr.mxu0 0.0
    %128 = vmatpush2.msra.mxu0 0.0
    %129 = vmatprep.mubr.f32.mxu0 0.0
    %130 = vmatmul.mubr.f32.gmra.mxu0 %v41
    %v131 = vpop.f32.mrf.mxu0
    %v132 = vadd.f32 %v63, %v131
    %v133 = vpop.f32.mrf.mxu0
    %134 = vdwg.mxu0
    %135 = vst [vmem:[#allocation7] sm:$0xff] %v132
    // Predicated region
    $region22: #{tpu_custom_call.1} parent=1 // pred_check
      _
    $region23: #{tpu_custom_call.1} parent=1 // pred_check_branch
      %137 = sbr.rel (0) target = $region25
    $region24: #{tpu_custom_call.1} parent=1 // pred_region
      %s139 = ssub.s32 128, 128
      %140 = vsyncadd [#allocation4], %s139
      %s142 = sshll.u32 [#allocation7], 4
      %s143 = int_to_ptr.vmem [resolvable:$true] %s142
      %145 = dma.vmem_to_hbm [thread:$0]  %s143, 128, %s3, [#allocation4]
    $region25: #{tpu_custom_call.1} parent=1 // pred_fallthru
      _
    // Predicated region
    $region26: #{tpu_custom_call.1} parent=1 // pred_check
      _
    $region27: #{tpu_custom_call.1} parent=1 // pred_check_branch
      %147 = sbr.rel (0) target = $region29
    $region28: #{tpu_custom_call.1} parent=1 // pred_region
      %148 = dma.done [#allocation4], 128
    $region29: #{tpu_custom_call.1} parent=1 // pred_fallthru
      _
    %149 = vsyncpa [#allocation3], 1
    %150 = vsyncpa [#allocation6], 1
    %151 = vsyncpa [#allocation4], 1

</llo_original>
